<compile_context>
chip_gen: v7x
topology: tpu7x:2x2x1
jax: 0.10.0
libtpu: 0.0.40
codegen_flags: <defaults>
</compile_context>

<pallas_src>
import functools

import jax
import jax.numpy as jnp
from jax.experimental import pallas as pl
from jax.experimental.pallas import tpu as pltpu


# ------------------------------ fused kernel ------------------------------- #

def _vae_fused_kernel(*refs, n_enc, n_dec, latent_dim):
    """Entire VAE forward for one batch tile, fully VMEM-resident.

    Ref order: x, eps, [enc_i W,b]*, fc_mulv W,b, fc1 W,b, [dec_i W,b]*,
               out_x, out_mulv.
    """
    it = iter(refs)
    x_ref = next(it)
    eps_ref = next(it)
    enc = [(next(it), next(it)) for _ in range(n_enc)]
    w_mulv_ref, b_mulv_ref = next(it), next(it)
    w_fc1_ref, b_fc1_ref = next(it), next(it)
    dec = [(next(it), next(it)) for _ in range(n_dec)]
    out_x_ref = next(it)
    out_mulv_ref = next(it)

    def linear(h_f32, w_ref, b_ref):
        # bf16 operands on the MXU, f32 accumulation, f32 bias add.
        acc = jnp.dot(h_f32.astype(w_ref.dtype), w_ref[...],
                      preferred_element_type=jnp.float32)
        return acc + b_ref[...]

    # encoder: relu(dropout(linear(.))) with p = 0  ->  relu(linear(.))
    h = x_ref[...].astype(jnp.float32)
    for w_ref, b_ref in enc:
        h = jnp.maximum(linear(h, w_ref, b_ref), 0.0)

    # fc_mu / fc_logvar fused into one matmul, result stays in registers/VMEM.
    mulv = linear(h, w_mulv_ref, b_mulv_ref)           # (tile_m, 2*latent) f32
    mu = mulv[:, :latent_dim]
    log_var = mulv[:, latent_dim:]

    # reparameterize (all f32) + fc1
    std = jnp.exp(log_var * 0.5)
    z = mu + eps_ref[...] * std
    h = linear(z, w_fc1_ref, b_fc1_ref)

    # decoder: ReLU on all but the last layer.
    for i, (w_ref, b_ref) in enumerate(dec):
        h = linear(h, w_ref, b_ref)
        if i < n_dec - 1:
            h = jnp.maximum(h, 0.0)

    out_x_ref[...] = h.astype(out_x_ref.dtype)
    out_mulv_ref[...] = mulv.astype(out_mulv_ref.dtype)


# ------------------------------ host wrapper ------------------------------- #

def _pad_rows(a, m_pad):
    m = a.shape[0]
    if m == m_pad:
        return a
    return jnp.pad(a, ((0, m_pad - m), (0, 0)))


def vae_forward(params, x, eps, encode_dims, decode_dims):
    M, d_in = x.shape
    latent = encode_dims[-1]
    d_out = decode_dims[-1]
    n_enc = len(encode_dims) - 2
    n_dec = len(decode_dims) - 1

    # Batch tiling: trivially grid=(1,) at small batch; block_m=256 + a
    # "parallel" grid axis for large batches (megacore sharding on v7x).
    if M <= 256:
        block_m, m_pad = M, M
    else:
        block_m = 256
        m_pad = pl.cdiv(M, block_m) * block_m
    x_p = _pad_rows(x, m_pad)
    eps_p = _pad_rows(eps, m_pad)
    grid = (m_pad // block_m,)

    def row_spec(n):
        return pl.BlockSpec((block_m, n), lambda i: (i, 0))

    def full_spec(shp):
        return pl.BlockSpec(shp, lambda i: (0,) * len(shp))

    inputs = [x_p, eps_p]
    in_specs = [row_spec(d_in), row_spec(latent)]

    def add_layer(w, b):
        inputs.extend([w, b])
        in_specs.extend([full_spec(w.shape), full_spec(b.shape)])

    for i in range(n_enc):
        add_layer(*params[f"enc_{i}"])
    add_layer(*params["fc_mulv"])
    add_layer(*params["fc1"])
    for i in range(n_dec):
        add_layer(*params[f"dec_{i}"])

    out_shape = (
        jax.ShapeDtypeStruct((m_pad, d_out), jnp.float32),
        jax.ShapeDtypeStruct((m_pad, 2 * latent), jnp.float32),
    )
    out_specs = (row_spec(d_out), row_spec(2 * latent))

    kernel = functools.partial(
        _vae_fused_kernel, n_enc=n_enc, n_dec=n_dec, latent_dim=latent)

    # Advisory cost estimate for the XLA scheduler.
    flops = 0
    prev = d_in
    for i in range(n_enc):
        flops += 2 * m_pad * prev * encode_dims[i + 1]
        prev = encode_dims[i + 1]
    flops += 2 * m_pad * prev * (2 * latent)        # fused fc_mu/fc_logvar
    flops += 2 * m_pad * latent * latent            # fc1
    prev = latent
    for i in range(n_dec):
        flops += 2 * m_pad * prev * decode_dims[i + 1]
        prev = decode_dims[i + 1]
    bytes_accessed = (sum(a.size * a.dtype.itemsize for a in inputs)
                      + m_pad * (d_out + 2 * latent) * 4)

    call_kwargs = {}
    if hasattr(pl, "CostEstimate"):
        call_kwargs["cost_estimate"] = pl.CostEstimate(
            flops=flops, transcendentals=m_pad * latent,
            bytes_accessed=bytes_accessed)
    cp_cls = (getattr(pltpu, "CompilerParams", None)
              or getattr(pltpu, "TPUCompilerParams", None))
    if cp_cls is not None:
        call_kwargs["compiler_params"] = cp_cls(
            dimension_semantics=("parallel",))

    x_rec_p, mulv_p = pl.pallas_call(
        kernel,
        grid=grid,
        in_specs=in_specs,
        out_specs=out_specs,
        out_shape=out_shape,
        **call_kwargs,
    )(*inputs)

    x_reconst = x_rec_p[:M]
    mu = mulv_p[:M, :latent]
    log_var = mulv_p[:M, latent:]
    return x_reconst, mu, log_var


# ------------------------------ parameters --------------------------------- #

def init_linear_params(key, in_dim, out_dim, w_dtype=jnp.bfloat16):
    """PyTorch-style U(-1/sqrt(in), 1/sqrt(in)); weight stored (in, out) bf16,
    bias stored (1, out) f32."""
    kw, kb = jax.random.split(key)
    bound = 1.0 / (in_dim ** 0.5)
    w = jax.random.uniform(kw, (in_dim, out_dim), jnp.float32, -bound, bound)
    b = jax.random.uniform(kb, (out_dim,), jnp.float32, -bound, bound)
    return w.astype(w_dtype), b.reshape(1, out_dim)


def init_vae_params(key, encode_dims, decode_dims, w_dtype=jnp.bfloat16):
    params = {}
    keys = iter(jax.random.split(key, 16))
    for i in range(len(encode_dims) - 2):
        params[f"enc_{i}"] = init_linear_params(
            next(keys), encode_dims[i], encode_dims[i + 1], w_dtype)
    w_mu, b_mu = init_linear_params(next(keys), encode_dims[-2], encode_dims[-1], w_dtype)
    w_lv, b_lv = init_linear_params(next(keys), encode_dims[-2], encode_dims[-1], w_dtype)
    # fc_mu / fc_logvar fused along the output axis -> one matmul in the kernel.
    params["fc_mulv"] = (jnp.concatenate([w_mu, w_lv], axis=1),
                         jnp.concatenate([b_mu, b_lv], axis=1))
    params["fc1"] = init_linear_params(next(keys), encode_dims[-1], encode_dims[-1], w_dtype)
    for i in range(len(decode_dims) - 1):
        params[f"dec_{i}"] = init_linear_params(
            next(keys), decode_dims[i], decode_dims[i + 1], w_dtype)
    return params


# --------------------------- pure-JAX reference ----------------------------- #

def vae_forward_ref(params, x, eps, encode_dims, decode_dims):
    def lin(h, w, b):
        return jnp.dot(h.astype(w.dtype), w,
                       preferred_element_type=jnp.float32) + b
    latent = encode_dims[-1]
    h = x
    for i in range(len(encode_dims) - 2):
        h = jnp.maximum(lin(h, *params[f"enc_{i}"]), 0.0)
    mulv = lin(h, *params["fc_mulv"])
    mu, log_var = mulv[:, :latent], mulv[:, latent:]
    z = mu + eps * jnp.exp(log_var * 0.5)
    h = lin(z, *params["fc1"])
    n_dec = len(decode_dims) - 1
    for i in range(n_dec):
        h = lin(h, *params[f"dec_{i}"])
        if i < n_dec - 1:
            h = jnp.maximum(h, 0.0)
    return h, mu, log_var


# ---------------------------------- main ------------------------------------ #

if __name__ == "__main__":
    # Small dims consistent with the module structure (scaled down from
    # [2000,1024,512,20] / [20,1024,2000]).
    encode_dims = [256, 128, 64, 16]
    decode_dims = [16, 128, 256]
    batch = 8

    key = jax.random.PRNGKey(0)
    k_params, k_x, k_eps = jax.random.split(key, 3)

    params = init_vae_params(k_params, encode_dims, decode_dims)
    x = jax.random.normal(k_x, (batch, encode_dims[0]), dtype=jnp.float32)
    eps = jax.random.normal(k_eps, (batch, encode_dims[-1]), dtype=jnp.float32)

    fwd = jax.jit(functools.partial(
        vae_forward, encode_dims=encode_dims, decode_dims=decode_dims))
    x_reconst, mu, log_var = fwd(params, x, eps)
    jax.block_until_ready((x_reconst, mu, log_var))

    assert x_reconst.shape == (batch, decode_dims[-1])
    assert mu.shape == (batch, encode_dims[-1])
    assert log_var.shape == (batch, encode_dims[-1])

    # Numerical check against a pure-JAX reference (same bf16 weights / f32 acc).
    xr_ref, mu_ref, lv_ref = vae_forward_ref(params, x, eps, encode_dims, decode_dims)
    assert jnp.allclose(x_reconst, xr_ref, atol=1e-2, rtol=1e-2)
    assert jnp.allclose(mu, mu_ref, atol=1e-2, rtol=1e-2)
    assert jnp.allclose(log_var, lv_ref, atol=1e-2, rtol=1e-2)

    print("KERNEL_OK")
</pallas_src>

<mosaic_0001>
module attributes {stable_mosaic.version = 11 : i64} {
  func.func @_vae_fused_kernel(%arg0: i32, %arg1: memref<8x256xf32, #tpu.memory_space<vmem>>, %arg2: memref<8x16xf32, #tpu.memory_space<vmem>>, %arg3: memref<256x128xbf16, #tpu.memory_space<vmem>>, %arg4: memref<1x128xf32, #tpu.memory_space<vmem>>, %arg5: memref<128x64xbf16, #tpu.memory_space<vmem>>, %arg6: memref<1x64xf32, #tpu.memory_space<vmem>>, %arg7: memref<64x32xbf16, #tpu.memory_space<vmem>>, %arg8: memref<1x32xf32, #tpu.memory_space<vmem>>, %arg9: memref<16x16xbf16, #tpu.memory_space<vmem>>, %arg10: memref<1x16xf32, #tpu.memory_space<vmem>>, %arg11: memref<16x128xbf16, #tpu.memory_space<vmem>>, %arg12: memref<1x128xf32, #tpu.memory_space<vmem>>, %arg13: memref<128x256xbf16, #tpu.memory_space<vmem>>, %arg14: memref<1x256xf32, #tpu.memory_space<vmem>>, %arg15: memref<8x256xf32, #tpu.memory_space<vmem>>, %arg16: memref<8x32xf32, #tpu.memory_space<vmem>>) attributes {dimension_semantics = [#tpu.dimension_semantics<parallel>], iteration_bounds = array<i64: 1>, scalar_prefetch = 0 : i64, scratch_operands = 0 : i64, tpu.core_type = #tpu.core_type<tc>, window_params = [{transform_indices = @transform_0, window_bounds = array<i64: 8, 256>}, {transform_indices = @transform_1, window_bounds = array<i64: 8, 16>}, {pipeline_mode = #tpu.pipeline_mode<synchronous>, transform_indices = @transform_2, window_bounds = array<i64: 256, 128>}, {pipeline_mode = #tpu.pipeline_mode<synchronous>, transform_indices = @transform_3, window_bounds = array<i64: 1, 128>}, {pipeline_mode = #tpu.pipeline_mode<synchronous>, transform_indices = @transform_4, window_bounds = array<i64: 128, 64>}, {pipeline_mode = #tpu.pipeline_mode<synchronous>, transform_indices = @transform_5, window_bounds = array<i64: 1, 64>}, {pipeline_mode = #tpu.pipeline_mode<synchronous>, transform_indices = @transform_6, window_bounds = array<i64: 64, 32>}, {pipeline_mode = #tpu.pipeline_mode<synchronous>, transform_indices = @transform_7, window_bounds = array<i64: 1, 32>}, {pipeline_mode = #tpu.pipeline_mode<synchronous>, transform_indices = @transform_8, window_bounds = array<i64: 16, 16>}, {pipeline_mode = #tpu.pipeline_mode<synchronous>, transform_indices = @transform_9, window_bounds = array<i64: 1, 16>}, {pipeline_mode = #tpu.pipeline_mode<synchronous>, transform_indices = @transform_10, window_bounds = array<i64: 16, 128>}, {pipeline_mode = #tpu.pipeline_mode<synchronous>, transform_indices = @transform_11, window_bounds = array<i64: 1, 128>}, {pipeline_mode = #tpu.pipeline_mode<synchronous>, transform_indices = @transform_12, window_bounds = array<i64: 128, 256>}, {pipeline_mode = #tpu.pipeline_mode<synchronous>, transform_indices = @transform_13, window_bounds = array<i64: 1, 256>}, {transform_indices = @transform_14, window_bounds = array<i64: 8, 256>}, {transform_indices = @transform_15, window_bounds = array<i64: 8, 32>}]} {
    %c0 = arith.constant 0 : index
    %c0_0 = arith.constant 0 : index
    %0 = vector.load %arg1[%c0, %c0_0] : memref<8x256xf32, #tpu.memory_space<vmem>>, vector<8x256xf32>
    %1 = arith.truncf %0 : vector<8x256xf32> to vector<8x256xbf16>
    %c0_1 = arith.constant 0 : index
    %c0_2 = arith.constant 0 : index
    %2 = vector.load %arg3[%c0_1, %c0_2] : memref<256x128xbf16, #tpu.memory_space<vmem>>, vector<256x128xbf16>
    %cst = arith.constant dense<0.000000e+00> : vector<8x128xf32>
    %3 = tpu.matmul %1, %2, %cst {dimension_numbers = #tpu.dot_dimension_numbers<[1], [0], [0], [1], [0, 0, 1, 1], [], []>} : vector<8x256xbf16>, vector<256x128xbf16>, vector<8x128xf32> -> vector<8x128xf32>
    %c0_3 = arith.constant 0 : index
    %c0_4 = arith.constant 0 : index
    %4 = vector.load %arg4[%c0_3, %c0_4] : memref<1x128xf32, #tpu.memory_space<vmem>>, vector<1x128xf32>
    %5 = vector.broadcast %4 : vector<1x128xf32> to vector<8x128xf32>
    %6 = arith.addf %3, %5 : vector<8x128xf32>
    %cst_5 = arith.constant 0.000000e+00 : f32
    %7 = vector.broadcast %cst_5 : f32 to vector<8x128xf32>
    %8 = arith.maximumf %6, %7 : vector<8x128xf32>
    %9 = arith.truncf %8 : vector<8x128xf32> to vector<8x128xbf16>
    %c0_6 = arith.constant 0 : index
    %c0_7 = arith.constant 0 : index
    %10 = vector.load %arg5[%c0_6, %c0_7] : memref<128x64xbf16, #tpu.memory_space<vmem>>, vector<128x64xbf16>
    %cst_8 = arith.constant dense<0.000000e+00> : vector<8x64xf32>
    %11 = tpu.matmul %9, %10, %cst_8 {dimension_numbers = #tpu.dot_dimension_numbers<[1], [0], [0], [1], [0, 0, 1, 1], [], []>} : vector<8x128xbf16>, vector<128x64xbf16>, vector<8x64xf32> -> vector<8x64xf32>
    %c0_9 = arith.constant 0 : index
    %c0_10 = arith.constant 0 : index
    %12 = vector.load %arg6[%c0_9, %c0_10] : memref<1x64xf32, #tpu.memory_space<vmem>>, vector<1x64xf32>
    %13 = vector.broadcast %12 : vector<1x64xf32> to vector<8x64xf32>
    %14 = arith.addf %11, %13 : vector<8x64xf32>
    %cst_11 = arith.constant 0.000000e+00 : f32
    %15 = vector.broadcast %cst_11 : f32 to vector<8x64xf32>
    %16 = arith.maximumf %14, %15 : vector<8x64xf32>
    %17 = arith.truncf %16 : vector<8x64xf32> to vector<8x64xbf16>
    %c0_12 = arith.constant 0 : index
    %c0_13 = arith.constant 0 : index
    %18 = vector.load %arg7[%c0_12, %c0_13] : memref<64x32xbf16, #tpu.memory_space<vmem>>, vector<64x32xbf16>
    %cst_14 = arith.constant dense<0.000000e+00> : vector<8x32xf32>
    %19 = tpu.matmul %17, %18, %cst_14 {dimension_numbers = #tpu.dot_dimension_numbers<[1], [0], [0], [1], [0, 0, 1, 1], [], []>} : vector<8x64xbf16>, vector<64x32xbf16>, vector<8x32xf32> -> vector<8x32xf32>
    %c0_15 = arith.constant 0 : index
    %c0_16 = arith.constant 0 : index
    %20 = vector.load %arg8[%c0_15, %c0_16] : memref<1x32xf32, #tpu.memory_space<vmem>>, vector<1x32xf32>
    %21 = vector.broadcast %20 : vector<1x32xf32> to vector<8x32xf32>
    %22 = arith.addf %19, %21 : vector<8x32xf32>
    %23 = vector.extract_strided_slice %22 {offsets = [0, 0], sizes = [8, 16], strides = [1, 1]} : vector<8x32xf32> to vector<8x16xf32>
    %24 = vector.extract_strided_slice %22 {offsets = [0, 16], sizes = [8, 16], strides = [1, 1]} : vector<8x32xf32> to vector<8x16xf32>
    %cst_17 = arith.constant 5.000000e-01 : f32
    %25 = vector.broadcast %cst_17 : f32 to vector<8x16xf32>
    %26 = arith.mulf %24, %25 : vector<8x16xf32>
    %27 = math.exp %26 : vector<8x16xf32>
    %c0_18 = arith.constant 0 : index
    %c0_19 = arith.constant 0 : index
    %28 = vector.load %arg2[%c0_18, %c0_19] : memref<8x16xf32, #tpu.memory_space<vmem>>, vector<8x16xf32>
    %29 = arith.mulf %28, %27 : vector<8x16xf32>
    %30 = arith.addf %23, %29 : vector<8x16xf32>
    %31 = arith.truncf %30 : vector<8x16xf32> to vector<8x16xbf16>
    %c0_20 = arith.constant 0 : index
    %c0_21 = arith.constant 0 : index
    %32 = vector.load %arg9[%c0_20, %c0_21] : memref<16x16xbf16, #tpu.memory_space<vmem>>, vector<16x16xbf16>
    %cst_22 = arith.constant dense<0.000000e+00> : vector<8x16xf32>
    %33 = tpu.matmul %31, %32, %cst_22 {dimension_numbers = #tpu.dot_dimension_numbers<[1], [0], [0], [1], [0, 0, 1, 1], [], []>} : vector<8x16xbf16>, vector<16x16xbf16>, vector<8x16xf32> -> vector<8x16xf32>
    %c0_23 = arith.constant 0 : index
    %c0_24 = arith.constant 0 : index
    %34 = vector.load %arg10[%c0_23, %c0_24] : memref<1x16xf32, #tpu.memory_space<vmem>>, vector<1x16xf32>
    %35 = vector.broadcast %34 : vector<1x16xf32> to vector<8x16xf32>
    %36 = arith.addf %33, %35 : vector<8x16xf32>
    %37 = arith.truncf %36 : vector<8x16xf32> to vector<8x16xbf16>
    %c0_25 = arith.constant 0 : index
    %c0_26 = arith.constant 0 : index
    %38 = vector.load %arg11[%c0_25, %c0_26] : memref<16x128xbf16, #tpu.memory_space<vmem>>, vector<16x128xbf16>
    %cst_27 = arith.constant dense<0.000000e+00> : vector<8x128xf32>
    %39 = tpu.matmul %37, %38, %cst_27 {dimension_numbers = #tpu.dot_dimension_numbers<[1], [0], [0], [1], [0, 0, 1, 1], [], []>} : vector<8x16xbf16>, vector<16x128xbf16>, vector<8x128xf32> -> vector<8x128xf32>
    %c0_28 = arith.constant 0 : index
    %c0_29 = arith.constant 0 : index
    %40 = vector.load %arg12[%c0_28, %c0_29] : memref<1x128xf32, #tpu.memory_space<vmem>>, vector<1x128xf32>
    %41 = vector.broadcast %40 : vector<1x128xf32> to vector<8x128xf32>
    %42 = arith.addf %39, %41 : vector<8x128xf32>
    %cst_30 = arith.constant 0.000000e+00 : f32
    %43 = vector.broadcast %cst_30 : f32 to vector<8x128xf32>
    %44 = arith.maximumf %42, %43 : vector<8x128xf32>
    %45 = arith.truncf %44 : vector<8x128xf32> to vector<8x128xbf16>
    %c0_31 = arith.constant 0 : index
    %c0_32 = arith.constant 0 : index
    %46 = vector.load %arg13[%c0_31, %c0_32] : memref<128x256xbf16, #tpu.memory_space<vmem>>, vector<128x256xbf16>
    %cst_33 = arith.constant dense<0.000000e+00> : vector<8x256xf32>
    %47 = tpu.matmul %45, %46, %cst_33 {dimension_numbers = #tpu.dot_dimension_numbers<[1], [0], [0], [1], [0, 0, 1, 1], [], []>} : vector<8x128xbf16>, vector<128x256xbf16>, vector<8x256xf32> -> vector<8x256xf32>
    %c0_34 = arith.constant 0 : index
    %c0_35 = arith.constant 0 : index
    %48 = vector.load %arg14[%c0_34, %c0_35] : memref<1x256xf32, #tpu.memory_space<vmem>>, vector<1x256xf32>
    %49 = vector.broadcast %48 : vector<1x256xf32> to vector<8x256xf32>
    %50 = arith.addf %47, %49 : vector<8x256xf32>
    %c0_36 = arith.constant 0 : index
    %c0_37 = arith.constant 0 : index
    %51 = vector.load %arg15[%c0_36, %c0_37] : memref<8x256xf32, #tpu.memory_space<vmem>>, vector<8x256xf32>
    tpu.vector_store %arg15[%c0_36, %c0_37], %50 {strides = array<i32>} : memref<8x256xf32, #tpu.memory_space<vmem>>, vector<8x256xf32>,
    %c0_38 = arith.constant 0 : index
    %c0_39 = arith.constant 0 : index
    %52 = vector.load %arg16[%c0_38, %c0_39] : memref<8x32xf32, #tpu.memory_space<vmem>>, vector<8x32xf32>
    tpu.vector_store %arg16[%c0_38, %c0_39], %22 {strides = array<i32>} : memref<8x32xf32, #tpu.memory_space<vmem>>, vector<8x32xf32>,
    return
  }
  func.func @transform_0(%arg0: i32) -> (i32, i32) {
    %c0_i32 = arith.constant 0 : i32
    %c0_i32_0 = arith.constant 0 : i32
    return %arg0, %c0_i32 : i32, i32
  }
  func.func @transform_1(%arg0: i32) -> (i32, i32) {
    %c0_i32 = arith.constant 0 : i32
    %c0_i32_0 = arith.constant 0 : i32
    return %arg0, %c0_i32 : i32, i32
  }
  func.func @transform_2(%arg0: i32) -> (i32, i32) {
    %c0_i32 = arith.constant 0 : i32
    %c0_i32_0 = arith.constant 0 : i32
    %c0_i32_1 = arith.constant 0 : i32
    return %c0_i32, %c0_i32_0 : i32, i32
  }
  func.func @transform_3(%arg0: i32) -> (i32, i32) {
    %c0_i32 = arith.constant 0 : i32
    %c0_i32_0 = arith.constant 0 : i32
    %c0_i32_1 = arith.constant 0 : i32
    return %c0_i32, %c0_i32_0 : i32, i32
  }
  func.func @transform_4(%arg0: i32) -> (i32, i32) {
    %c0_i32 = arith.constant 0 : i32
    %c0_i32_0 = arith.constant 0 : i32
    %c0_i32_1 = arith.constant 0 : i32
    return %c0_i32, %c0_i32_0 : i32, i32
  }
  func.func @transform_5(%arg0: i32) -> (i32, i32) {
    %c0_i32 = arith.constant 0 : i32
    %c0_i32_0 = arith.constant 0 : i32
    %c0_i32_1 = arith.constant 0 : i32
    return %c0_i32, %c0_i32_0 : i32, i32
  }
  func.func @transform_6(%arg0: i32) -> (i32, i32) {
    %c0_i32 = arith.constant 0 : i32
    %c0_i32_0 = arith.constant 0 : i32
    %c0_i32_1 = arith.constant 0 : i32
    return %c0_i32, %c0_i32_0 : i32, i32
  }
  func.func @transform_7(%arg0: i32) -> (i32, i32) {
    %c0_i32 = arith.constant 0 : i32
    %c0_i32_0 = arith.constant 0 : i32
    %c0_i32_1 = arith.constant 0 : i32
    return %c0_i32, %c0_i32_0 : i32, i32
  }
  func.func @transform_8(%arg0: i32) -> (i32, i32) {
    %c0_i32 = arith.constant 0 : i32
    %c0_i32_0 = arith.constant 0 : i32
    %c0_i32_1 = arith.constant 0 : i32
    return %c0_i32, %c0_i32_0 : i32, i32
  }
  func.func @transform_9(%arg0: i32) -> (i32, i32) {
    %c0_i32 = arith.constant 0 : i32
    %c0_i32_0 = arith.constant 0 : i32
    %c0_i32_1 = arith.constant 0 : i32
    return %c0_i32, %c0_i32_0 : i32, i32
  }
  func.func @transform_10(%arg0: i32) -> (i32, i32) {
    %c0_i32 = arith.constant 0 : i32
    %c0_i32_0 = arith.constant 0 : i32
    %c0_i32_1 = arith.constant 0 : i32
    return %c0_i32, %c0_i32_0 : i32, i32
  }
  func.func @transform_11(%arg0: i32) -> (i32, i32) {
    %c0_i32 = arith.constant 0 : i32
    %c0_i32_0 = arith.constant 0 : i32
    %c0_i32_1 = arith.constant 0 : i32
    return %c0_i32, %c0_i32_0 : i32, i32
  }
  func.func @transform_12(%arg0: i32) -> (i32, i32) {
    %c0_i32 = arith.constant 0 : i32
    %c0_i32_0 = arith.constant 0 : i32
    %c0_i32_1 = arith.constant 0 : i32
    return %c0_i32, %c0_i32_0 : i32, i32
  }
  func.func @transform_13(%arg0: i32) -> (i32, i32) {
    %c0_i32 = arith.constant 0 : i32
    %c0_i32_0 = arith.constant 0 : i32
    %c0_i32_1 = arith.constant 0 : i32
    return %c0_i32, %c0_i32_0 : i32, i32
  }
  func.func @transform_14(%arg0: i32) -> (i32, i32) {
    %c0_i32 = arith.constant 0 : i32
    %c0_i32_0 = arith.constant 0 : i32
    return %arg0, %c0_i32 : i32, i32
  }
  func.func @transform_15(%arg0: i32) -> (i32, i32) {
    %c0_i32 = arith.constant 0 : i32
    %c0_i32_0 = arith.constant 0 : i32
    return %arg0, %c0_i32 : i32, i32
  }
}

</mosaic_0001>

<llo_original>
// kernel: vae_forward.1
$region0: #{vae_forward.1}
  #allocation0 [shape = 'u32[]', space=smem, size = 0x4, offset = 0x4, fixed_abs, tag = 'smem constant byte address 0x4 - core index']
  #allocation1 [shape = 'u32[144,128]{1,0:T(1,128)}', space=vmem, size = 0x12000, scoped, tag = 'internal scratch']
  %s0 = inlined_call_operand.hbm [shape: f32[8,256], index: 0, kind: input, shape index: {}]
  %s1 = inlined_call_operand.vmem [shape: f32[8,16], index: 1, kind: input, shape index: {}]
  %s2 = inlined_call_operand.vmem [shape: bf16[256,128], index: 2, kind: input, shape index: {}]
  %s3 = inlined_call_operand.vmem [shape: f32[1,128], index: 3, kind: input, shape index: {}]
  %s4 = inlined_call_operand.vmem [shape: bf16[128,64], index: 4, kind: input, shape index: {}]
  %s5 = inlined_call_operand.hbm [shape: f32[1,64], index: 5, kind: input, shape index: {}]
  %s6 = inlined_call_operand.vmem [shape: bf16[64,32], index: 6, kind: input, shape index: {}]
  %s7 = inlined_call_operand.hbm [shape: f32[1,32], index: 7, kind: input, shape index: {}]
  %s8 = inlined_call_operand.hbm [shape: bf16[16,16], index: 8, kind: input, shape index: {}]
  %s9 = inlined_call_operand.hbm [shape: f32[1,16], index: 9, kind: input, shape index: {}]
  %s10 = inlined_call_operand.hbm [shape: bf16[16,128], index: 10, kind: input, shape index: {}]
  %s11 = inlined_call_operand.hbm [shape: f32[1,128], index: 11, kind: input, shape index: {}]
  %s12 = inlined_call_operand.hbm [shape: bf16[128,256], index: 12, kind: input, shape index: {}]
  %s13 = inlined_call_operand.hbm [shape: f32[1,256], index: 13, kind: input, shape index: {}]
  %s14 = inlined_call_operand.hbm [shape: f32[8,256], index: 14, kind: output, shape index: {0}]
  %s15 = inlined_call_operand.vmem [shape: f32[8,32], index: 15, kind: output, shape index: {1}]
  %16 = xla_tuple %s14, %s15
  %s17 = sld [smem:[#allocation0]]
  $region110: #{vae_forward.1} parent=0
    _
  %s19 = ssub.s32 1, %s17
  %s20 = scalar_select 0, %s19, %s17
  $region1: #{vae_forward.1} parent=0
    #allocation2 [shape = 'u8[8192]{0}', space=vmem, size = 0x2000, scoped, tag = 'input window, operand 0, single buffered']
    #allocation3 [shape = 's32[1]{0}', space=sflag, size = 0x4, scoped, tag = 'scoped memory for vae_forward.1']
    #allocation4 [shape = 's32[1]{0}', space=sflag, size = 0x4, scoped, tag = 'scoped memory for vae_forward.1']
    #allocation5 [shape = 'u8[512]{0}', space=vmem, size = 0x400, scoped, tag = 'input window, operand 5, single buffered']
    #allocation6 [shape = 's32[1]{0}', space=sflag, size = 0x4, scoped, tag = 'scoped memory for vae_forward.1']
    #allocation7 [shape = 'u8[512]{0}', space=vmem, size = 0x400, scoped, tag = 'input window, operand 7, single buffered']
    #allocation8 [shape = 'u8[4096]{0}', space=vmem, size = 0x1000, scoped, tag = 'input window, operand 8, single buffered']
    #allocation9 [shape = 's32[1]{0}', space=sflag, size = 0x4, scoped, tag = 'scoped memory for vae_forward.1']
    #allocation10 [shape = 'u8[512]{0}', space=vmem, size = 0x400, scoped, tag = 'input window, operand 9, single buffered']
    #allocation11 [shape = 'u8[4096]{0}', space=vmem, size = 0x1000, scoped, tag = 'input window, operand 10, single buffered']
    #allocation12 [shape = 's32[1]{0}', space=sflag, size = 0x4, scoped, tag = 'scoped memory for vae_forward.1']
    #allocation13 [shape = 'u8[512]{0}', space=vmem, size = 0x400, scoped, tag = 'input window, operand 11, single buffered']
    #allocation14 [shape = 'u8[65536]{0}', space=vmem, size = 0x10000, scoped, tag = 'input window, operand 12, single buffered']
    #allocation15 [shape = 's32[1]{0}', space=sflag, size = 0x4, scoped, tag = 'scoped memory for vae_forward.1']
    #allocation16 [shape = 'u8[1024]{0}', space=vmem, size = 0x400, scoped, tag = 'input window, operand 13, single buffered']
    #allocation17 [shape = 'u8[8192]{0}', space=vmem, size = 0x2000, scoped, tag = 'output window, operand 0, single buffered']
    %21 = vsyncpa [#allocation3], 0
    %22 = vsyncpa [#allocation6], 0
    %23 = vsyncpa [#allocation9], 0
    %24 = vsyncpa [#allocation12], 0
    %25 = vsyncpa [#allocation15], 0
    %26 = vsyncpa [#allocation4], 0
    // Predicated region
    $region2: #{vae_forward.1} parent=1 // pred_check
      _
    $region3: #{vae_forward.1} parent=1 // pred_check_branch
      %28 = sbr.rel (0) target = $region5
    $region4: #{vae_forward.1} parent=1 // pred_region
      %s30 = ssub.s32 256, 256
      %31 = vsyncadd [#allocation3], %s30
      %s33 = sshll.u32 [#allocation2], 4
      %s34 = int_to_ptr.vmem [resolvable:$true] %s33
      %36 = dma.hbm_to_vmem [thread:$0]  %s0, 256, %s34, [#allocation3]
    $region5: #{vae_forward.1} parent=1 // pred_fallthru
      _
    // Predicated region
    $region6: #{vae_forward.1} parent=1 // pred_check
      _
    $region7: #{vae_forward.1} parent=1 // pred_check_branch
      %38 = sbr.rel (0) target = $region9
    $region8: #{vae_forward.1} parent=1 // pred_region
      _
    $region9: #{vae_forward.1} parent=1 // pred_fallthru
      _
    // Predicated region
    $region10: #{vae_forward.1} parent=1 // pred_check
      _
    $region11: #{vae_forward.1} parent=1 // pred_check_branch
      %40 = sbr.rel (0) target = $region13
    $region12: #{vae_forward.1} parent=1 // pred_region
      _
    $region13: #{vae_forward.1} parent=1 // pred_fallthru
      _
    // Predicated region
    $region14: #{vae_forward.1} parent=1 // pred_check
      _
    $region15: #{vae_forward.1} parent=1 // pred_check_branch
      %42 = sbr.rel (0) target = $region17
    $region16: #{vae_forward.1} parent=1 // pred_region
      _
    $region17: #{vae_forward.1} parent=1 // pred_fallthru
      _
    // Predicated region
    $region18: #{vae_forward.1} parent=1 // pred_check
      _
    $region19: #{vae_forward.1} parent=1 // pred_check_branch
      %44 = sbr.rel (0) target = $region21
    $region20: #{vae_forward.1} parent=1 // pred_region
      _
    $region21: #{vae_forward.1} parent=1 // pred_fallthru
      _
    // Predicated region
    $region22: #{vae_forward.1} parent=1 // pred_check
      _
    $region23: #{vae_forward.1} parent=1 // pred_check_branch
      %46 = sbr.rel (0) target = $region25
    $region24: #{vae_forward.1} parent=1 // pred_region
      %s48 = ssub.s32 16, 16
      %49 = vsyncadd [#allocation6], %s48
      %s51 = sshll.u32 [#allocation5], 4
      %s52 = int_to_ptr.vmem [resolvable:$true] %s51
      %54 = dma.hbm_to_vmem [thread:$0]  %s5, 16, %s52, [#allocation6]
    $region25: #{vae_forward.1} parent=1 // pred_fallthru
      _
    // Predicated region
    $region26: #{vae_forward.1} parent=1 // pred_check
      _
    $region27: #{vae_forward.1} parent=1 // pred_check_branch
      %56 = sbr.rel (0) target = $region29
    $region28: #{vae_forward.1} parent=1 // pred_region
      _
    $region29: #{vae_forward.1} parent=1 // pred_fallthru
      _
    // Predicated region
    $region30: #{vae_forward.1} parent=1 // pred_check
      _
    $region31: #{vae_forward.1} parent=1 // pred_check_branch
      %58 = sbr.rel (0) target = $region33
    $region32: #{vae_forward.1} parent=1 // pred_region
      %s60 = ssub.s32 16, 16
      %61 = vsyncadd [#allocation6], %s60
      %s63 = sshll.u32 [#allocation7], 4
      %s64 = int_to_ptr.vmem [resolvable:$true] %s63
      %66 = dma.hbm_to_vmem [thread:$0]  %s7, 16, %s64, [#allocation6]
    $region33: #{vae_forward.1} parent=1 // pred_fallthru
      _
    // Predicated region
    $region34: #{vae_forward.1} parent=1 // pred_check
      _
    $region35: #{vae_forward.1} parent=1 // pred_check_branch
      %68 = sbr.rel (0) target = $region37
    $region36: #{vae_forward.1} parent=1 // pred_region
      %s70 = ssub.s32 128, 128
      %71 = vsyncadd [#allocation9], %s70
      %s72 = sshll.u32 [#allocation8], 4
      %s73 = int_to_ptr.vmem [resolvable:$true] %s72
      %78 = dma.hbm_to_vmem [thread:$0]  %s8, 128, %s73, [#allocation9], 64, 64, 4
    $region37: #{vae_forward.1} parent=1 // pred_fallthru
      _
    // Predicated region
    $region38: #{vae_forward.1} parent=1 // pred_check
      _
    $region39: #{vae_forward.1} parent=1 // pred_check_branch
      %80 = sbr.rel (0) target = $region41
    $region40: #{vae_forward.1} parent=1 // pred_region
      %s82 = ssub.s32 16, 16
      %83 = vsyncadd [#allocation9], %s82
      %s85 = sshll.u32 [#allocation10], 4
      %s86 = int_to_ptr.vmem [resolvable:$true] %s85
      %88 = dma.hbm_to_vmem [thread:$0]  %s9, 16, %s86, [#allocation9]
    $region41: #{vae_forward.1} parent=1 // pred_fallthru
      _
    // Predicated region
    $region42: #{vae_forward.1} parent=1 // pred_check
      _
    $region43: #{vae_forward.1} parent=1 // pred_check_branch
      %90 = sbr.rel (0) target = $region45
    $region44: #{vae_forward.1} parent=1 // pred_region
      %s92 = ssub.s32 128, 128
      %93 = vsyncadd [#allocation12], %s92
      %s94 = sshll.u32 [#allocation11], 4
      %s95 = int_to_ptr.vmem [resolvable:$true] %s94
      %100 = dma.hbm_to_vmem [thread:$0]  %s10, 128, %s95, [#allocation12], 64, 64, 4
    $region45: #{vae_forward.1} parent=1 // pred_fallthru
      _
    // Predicated region
    $region46: #{vae_forward.1} parent=1 // pred_check
      _
    $region47: #{vae_forward.1} parent=1 // pred_check_branch
      %102 = sbr.rel (0) target = $region49
    $region48: #{vae_forward.1} parent=1 // pred_region
      %s104 = ssub.s32 16, 16
      %105 = vsyncadd [#allocation12], %s104
      %s107 = sshll.u32 [#allocation13], 4
      %s108 = int_to_ptr.vmem [resolvable:$true] %s107
      %110 = dma.hbm_to_vmem [thread:$0]  %s11, 16, %s108, [#allocation12]
    $region49: #{vae_forward.1} parent=1 // pred_fallthru
      _
    // Predicated region
    $region50: #{vae_forward.1} parent=1 // pred_check
      _
    $region51: #{vae_forward.1} parent=1 // pred_check_branch
      %112 = sbr.rel (0) target = $region53
    $region52: #{vae_forward.1} parent=1 // pred_region
      %s114 = ssub.s32 2048, 2048
      %115 = vsyncadd [#allocation15], %s114
      %s116 = sshll.u32 [#allocation14], 4
      %s117 = int_to_ptr.vmem [resolvable:$true] %s116
      %122 = dma.hbm_to_vmem [thread:$0]  %s12, 2048, %s117, [#allocation15], 128, 128, 8
    $region53: #{vae_forward.1} parent=1 // pred_fallthru
      _
    // Predicated region
    $region54: #{vae_forward.1} parent=1 // pred_check
      _
    $region55: #{vae_forward.1} parent=1 // pred_check_branch
      %124 = sbr.rel (0) target = $region57
    $region56: #{vae_forward.1} parent=1 // pred_region
      %s126 = ssub.s32 32, 32
      %127 = vsyncadd [#allocation15], %s126
      %s129 = sshll.u32 [#allocation16], 4
      %s130 = int_to_ptr.vmem [resolvable:$true] %s129
      %132 = dma.hbm_to_vmem [thread:$0]  %s13, 32, %s130, [#allocation15]
    $region57: #{vae_forward.1} parent=1 // pred_fallthru
      _
    // Predicated region
    $region58: #{vae_forward.1} parent=1 // pred_check
      _
    $region59: #{vae_forward.1} parent=1 // pred_check_branch
      %134 = sbr.rel (0) target = $region61
    $region60: #{vae_forward.1} parent=1 // pred_region
      %135 = dma.done [#allocation3], 256
    $region61: #{vae_forward.1} parent=1 // pred_fallthru
      _
    // Predicated region
    $region62: #{vae_forward.1} parent=1 // pred_check
      _
    $region63: #{vae_forward.1} parent=1 // pred_check_branch
      %137 = sbr.rel (0) target = $region65
    $region64: #{vae_forward.1} parent=1 // pred_region
      %138 = dma.done [#allocation6], 16
    $region65: #{vae_forward.1} parent=1 // pred_fallthru
      _
    // Predicated region
    $region66: #{vae_forward.1} parent=1 // pred_check
      _
    $region67: #{vae_forward.1} parent=1 // pred_check_branch
      %140 = sbr.rel (0) target = $region69
    $region68: #{vae_forward.1} parent=1 // pred_region
      %141 = dma.done [#allocation6], 16
    $region69: #{vae_forward.1} parent=1 // pred_fallthru
      _
    // Predicated region
    $region70: #{vae_forward.1} parent=1 // pred_check
      _
    $region71: #{vae_forward.1} parent=1 // pred_check_branch
      %143 = sbr.rel (0) target = $region73
    $region72: #{vae_forward.1} parent=1 // pred_region
      %144 = dma.done [#allocation9], 128
    $region73: #{vae_forward.1} parent=1 // pred_fallthru
      _
    // Predicated region
    $region74: #{vae_forward.1} parent=1 // pred_check
      _
    $region75: #{vae_forward.1} parent=1 // pred_check_branch
      %146 = sbr.rel (0) target = $region77
    $region76: #{vae_forward.1} parent=1 // pred_region
      %147 = dma.done [#allocation9], 16
    $region77: #{vae_forward.1} parent=1 // pred_fallthru
      _
    // Predicated region
    $region78: #{vae_forward.1} parent=1 // pred_check
      _
    $region79: #{vae_forward.1} parent=1 // pred_check_branch
      %149 = sbr.rel (0) target = $region81
    $region80: #{vae_forward.1} parent=1 // pred_region
      %150 = dma.done [#allocation12], 128
    $region81: #{vae_forward.1} parent=1 // pred_fallthru
      _
    // Predicated region
    $region82: #{vae_forward.1} parent=1 // pred_check
      _
    $region83: #{vae_forward.1} parent=1 // pred_check_branch
      %152 = sbr.rel (0) target = $region85
    $region84: #{vae_forward.1} parent=1 // pred_region
      %153 = dma.done [#allocation12], 16
    $region85: #{vae_forward.1} parent=1 // pred_fallthru
      _
    // Predicated region
    $region86: #{vae_forward.1} parent=1 // pred_check
      _
    $region87: #{vae_forward.1} parent=1 // pred_check_branch
      %155 = sbr.rel (0) target = $region89
    $region88: #{vae_forward.1} parent=1 // pred_region
      %156 = dma.done [#allocation15], 2048
    $region89: #{vae_forward.1} parent=1 // pred_fallthru
      _
    // Predicated region
    $region90: #{vae_forward.1} parent=1 // pred_check
      _
    $region91: #{vae_forward.1} parent=1 // pred_check_branch
      %158 = sbr.rel (0) target = $region93
    $region92: #{vae_forward.1} parent=1 // pred_region
      %159 = dma.done [#allocation15], 32
    $region93: #{vae_forward.1} parent=1 // pred_fallthru
      _
    %v161 = vld [vmem:[#allocation2] sm:$0xff]
    %v162 = vld [vmem:[#allocation2 + $0x8] sm:$0xff]
    %v163 = vpack.c.bf16 %v161, %v161
    %v164 = vpack.c.bf16 %v162, %v162
    %v165 = vld [vmem:[%s2] sm:$0xf]
    %v166 = vld [vmem:[%s2 + $0x4] sm:$0xf]
    %v167 = vld [vmem:[%s2 + $0x8] sm:$0xf]
    %v168 = vld [vmem:[%s2 + $0xc] sm:$0xf]
    %v169 = vld [vmem:[%s2 + $0x10] sm:$0xf]
    %v170 = vld [vmem:[%s2 + $0x14] sm:$0xf]
    %v171 = vld [vmem:[%s2 + $0x18] sm:$0xf]
    %v172 = vld [vmem:[%s2 + $0x1c] sm:$0xf]
    %v173 = vld [vmem:[%s2 + $0x20] sm:$0xf]
    %v174 = vld [vmem:[%s2 + $0x24] sm:$0xf]
    %v175 = vld [vmem:[%s2 + $0x28] sm:$0xf]
    %v176 = vld [vmem:[%s2 + $0x2c] sm:$0xf]
    %v177 = vld [vmem:[%s2 + $0x30] sm:$0xf]
    %v178 = vld [vmem:[%s2 + $0x34] sm:$0xf]
    %v179 = vld [vmem:[%s2 + $0x38] sm:$0xf]
    %v180 = vld [vmem:[%s2 + $0x3c] sm:$0xf]
    %v181 = vld [vmem:[%s2 + $0x40] sm:$0xf]
    %v182 = vld [vmem:[%s2 + $0x44] sm:$0xf]
    %v183 = vld [vmem:[%s2 + $0x48] sm:$0xf]
    %v184 = vld [vmem:[%s2 + $0x4c] sm:$0xf]
    %v185 = vld [vmem:[%s2 + $0x50] sm:$0xf]
    %v186 = vld [vmem:[%s2 + $0x54] sm:$0xf]
    %v187 = vld [vmem:[%s2 + $0x58] sm:$0xf]
    %v188 = vld [vmem:[%s2 + $0x5c] sm:$0xf]
    %v189 = vld [vmem:[%s2 + $0x60] sm:$0xf]
    %v190 = vld [vmem:[%s2 + $0x64] sm:$0xf]
    %v191 = vld [vmem:[%s2 + $0x68] sm:$0xf]
    %v192 = vld [vmem:[%s2 + $0x6c] sm:$0xf]
    %v193 = vld [vmem:[%s2 + $0x70] sm:$0xf]
    %v194 = vld [vmem:[%s2 + $0x74] sm:$0xf]
    %v195 = vld [vmem:[%s2 + $0x78] sm:$0xf]
    %v196 = vld [vmem:[%s2 + $0x7c] sm:$0xf]
    %v197 = vld [vmem:[%s3] sm:$0x1]
    %v199 = vlaneseq
    %v200 = vshrl.u32 %v199, 7
    %v201 = vsub.s32 0, %v200
    %v202 = vrot.slane %v197, %v201
    %v236 = vunpack.c.l.b16 %v165
    %v237 = vunpack.c.l.b16 %v166
    %v238 = vunpack.c.l.b16 %v167
    %v239 = vunpack.c.l.b16 %v168
    %v240 = vunpack.c.l.b16 %v169
    %v241 = vunpack.c.l.b16 %v170
    %v242 = vunpack.c.l.b16 %v171
    %v243 = vunpack.c.l.b16 %v172
    %v244 = vunpack.c.l.b16 %v173
    %v245 = vunpack.c.l.b16 %v174
    %v246 = vunpack.c.l.b16 %v175
    %v247 = vunpack.c.l.b16 %v176
    %v248 = vunpack.c.l.b16 %v177
    %v249 = vunpack.c.l.b16 %v178
    %v250 = vunpack.c.l.b16 %v179
    %v251 = vunpack.c.l.b16 %v180
    %v252 = vunpack.c.l.b16 %v181
    %v253 = vunpack.c.l.b16 %v182
    %v254 = vunpack.c.l.b16 %v183
    %v255 = vunpack.c.l.b16 %v184
    %v256 = vunpack.c.l.b16 %v185
    %v257 = vunpack.c.l.b16 %v186
    %v258 = vunpack.c.l.b16 %v187
    %v259 = vunpack.c.l.b16 %v188
    %v260 = vunpack.c.l.b16 %v189
    %v261 = vunpack.c.l.b16 %v190
    %v262 = vunpack.c.l.b16 %v191
    %v263 = vunpack.c.l.b16 %v192
    %v264 = vunpack.c.l.b16 %v193
    %v265 = vunpack.c.l.b16 %v194
    %v266 = vunpack.c.l.b16 %v195
    %v267 = vunpack.c.l.b16 %v196
    %v268 = vpack.c.b16 %v237, %v236
    %v269 = vpack.c.b16 %v239, %v238
    %v270 = vpack.c.b16 %v241, %v240
    %v271 = vpack.c.b16 %v243, %v242
    %v272 = vpack.c.b16 %v245, %v244
    %v273 = vpack.c.b16 %v247, %v246
    %v274 = vpack.c.b16 %v249, %v248
    %v275 = vpack.c.b16 %v251, %v250
    %v276 = vpack.c.b16 %v253, %v252
    %v277 = vpack.c.b16 %v255, %v254
    %v278 = vpack.c.b16 %v257, %v256
    %v279 = vpack.c.b16 %v259, %v258
    %v280 = vpack.c.b16 %v261, %v260
    %v281 = vpack.c.b16 %v263, %v262
    %v282 = vpack.c.b16 %v265, %v264
    %v283 = vpack.c.b16 %v267, %v266
    %300 = vmatprep.subr.bf16.mxu0 0
    %301 = vmatpush1.bf16.msra.mxu0 %v268
    %302 = vmatprep.subr.bf16.mxu0 0
    %303 = vmatpush1.bf16.msra.mxu0 %v269
    %304 = vmatprep.subr.bf16.mxu0 0
    %305 = vmatpush1.bf16.msra.mxu0 %v270
    %306 = vmatprep.subr.bf16.mxu0 0
    %307 = vmatpush1.bf16.msra.mxu0 %v271
    %308 = vmatprep.subr.bf16.mxu0 0
    %309 = vmatpush1.bf16.msra.mxu0 %v272
    %310 = vmatprep.subr.bf16.mxu0 0
    %311 = vmatpush1.bf16.msra.mxu0 %v273
    %312 = vmatprep.subr.bf16.mxu0 0
    %313 = vmatpush1.bf16.msra.mxu0 %v274
    %314 = vmatprep.subr.bf16.mxu0 0
    %315 = vmatpush1.bf16.msra.mxu0 %v275
    %316 = vmatprep.subr.bf16.mxu0 0
    %317 = vmatpush1.bf16.msra.mxu0 %v276
    %318 = vmatprep.subr.bf16.mxu0 0
    %319 = vmatpush1.bf16.msra.mxu0 %v277
    %320 = vmatprep.subr.bf16.mxu0 0
    %321 = vmatpush1.bf16.msra.mxu0 %v278
    %322 = vmatprep.subr.bf16.mxu0 0
    %323 = vmatpush1.bf16.msra.mxu0 %v279
    %324 = vmatprep.subr.bf16.mxu0 0
    %325 = vmatpush1.bf16.msra.mxu0 %v280
    %326 = vmatprep.subr.bf16.mxu0 0
    %327 = vmatpush1.bf16.msra.mxu0 %v281
    %328 = vmatprep.subr.bf16.mxu0 0
    %329 = vmatpush1.bf16.msra.mxu0 %v282
    %330 = vmatprep.subr.bf16.mxu0 0
    %331 = vmatpush1.bf16.msra.mxu0 %v283
    %332 = vmatprep.mubr.bf16.mxu0 %v164
    %333 = vmatmul.mubr.bf16.gmra.mrb[0].mxu0 %v163
    %v334 = vpop.f32.mrb[0].mxu0
    %v335 = vadd.f32 %v202, %v334
    %v336 = vpop.f32.mrb[0].mxu0
    %v337 = vpop.f32.mrb[0].mxu0
    %v338 = vpop.f32.mrb[0].mxu0
    %339 = vdwg.mxu0
    %v340 = vmax.f32 %v335, 0.0
    %v341 = vpack.c.bf16 %v340, %v340
    %v342 = vld [vmem:[%s4] sm:$0xf]
    %v343 = vld [vmem:[%s4 + $0x4] sm:$0xf]
    %v344 = vld [vmem:[%s4 + $0x8] sm:$0xf]
    %v345 = vld [vmem:[%s4 + $0xc] sm:$0xf]
    %v346 = vld [vmem:[%s4 + $0x10] sm:$0xf]
    %v347 = vld [vmem:[%s4 + $0x14] sm:$0xf]
    %v348 = vld [vmem:[%s4 + $0x18] sm:$0xf]
    %v349 = vld [vmem:[%s4 + $0x1c] sm:$0xf]
    %v350 = vld [vmem:[%s4 + $0x20] sm:$0xf]
    %v351 = vld [vmem:[%s4 + $0x24] sm:$0xf]
    %v352 = vld [vmem:[%s4 + $0x28] sm:$0xf]
    %v353 = vld [vmem:[%s4 + $0x2c] sm:$0xf]
    %v354 = vld [vmem:[%s4 + $0x30] sm:$0xf]
    %v355 = vld [vmem:[%s4 + $0x34] sm:$0xf]
    %v356 = vld [vmem:[%s4 + $0x38] sm:$0xf]
    %v357 = vld [vmem:[%s4 + $0x3c] sm:$0xf]
    %v358 = vld [vmem:[#allocation5] sm:$0x1]
    %v360 = vlaneseq
    %v361 = vshrl.u32 %v360, 7
    %v362 = vsub.s32 0, %v361
    %v363 = vrot.slane %v358, %v362
    %v381 = vunpack.c.l.b16 %v342
    %v382 = vunpack.c.l.b16 %v343
    %v383 = vunpack.c.l.b16 %v344
    %v384 = vunpack.c.l.b16 %v345
    %v385 = vunpack.c.l.b16 %v346
    %v386 = vunpack.c.l.b16 %v347
    %v387 = vunpack.c.l.b16 %v348
    %v388 = vunpack.c.l.b16 %v349
    %v389 = vunpack.c.l.b16 %v350
    %v390 = vunpack.c.l.b16 %v351
    %v391 = vunpack.c.l.b16 %v352
    %v392 = vunpack.c.l.b16 %v353
    %v393 = vunpack.c.l.b16 %v354
    %v394 = vunpack.c.l.b16 %v355
    %v395 = vunpack.c.l.b16 %v356
    %v396 = vunpack.c.l.b16 %v357
    %v397 = vpack.c.b16 %v382, %v381
    %v398 = vpack.c.b16 %v384, %v383
    %v399 = vpack.c.b16 %v386, %v385
    %v400 = vpack.c.b16 %v388, %v387
    %v401 = vpack.c.b16 %v390, %v389
    %v402 = vpack.c.b16 %v392, %v391
    %v403 = vpack.c.b16 %v394, %v393
    %v404 = vpack.c.b16 %v396, %v395
    %413 = vmatprep.subr.bf16.mxu0 0
    %414 = vmatpush1.bf16.msra.mxu0 %v397
    %415 = vmatprep.subr.bf16.mxu0 0
    %416 = vmatpush1.bf16.msra.mxu0 %v398
    %417 = vmatprep.subr.bf16.mxu0 0
    %418 = vmatpush1.bf16.msra.mxu0 %v399
    %419 = vmatprep.subr.bf16.mxu0 0
    %420 = vmatpush1.bf16.msra.mxu0 %v400
    %421 = vmatprep.subr.bf16.mxu0 0
    %422 = vmatpush1.bf16.msra.mxu0 %v401
    %423 = vmatprep.subr.bf16.mxu0 0
    %424 = vmatpush1.bf16.msra.mxu0 %v402
    %425 = vmatprep.subr.bf16.mxu0 0
    %426 = vmatpush1.bf16.msra.mxu0 %v403
    %427 = vmatprep.subr.bf16.mxu0 0
    %428 = vmatpush1.bf16.msra.mxu0 %v404
    %429 = vmatprep.subr.bf16.mxu0 0
    %430 = vmatpush1.bf16.msra.mxu0 0
    %431 = vmatprep.subr.bf16.mxu0 0
    %432 = vmatpush1.bf16.msra.mxu0 0
    %433 = vmatprep.subr.bf16.mxu0 0
    %434 = vmatpush1.bf16.msra.mxu0 0
    %435 = vmatprep.subr.bf16.mxu0 0
    %436 = vmatpush1.bf16.msra.mxu0 0
    %437 = vmatprep.subr.bf16.mxu0 0
    %438 = vmatpush1.bf16.msra.mxu0 0
    %439 = vmatprep.subr.bf16.mxu0 0
    %440 = vmatpush1.bf16.msra.mxu0 0
    %441 = vmatprep.subr.bf16.mxu0 0
    %442 = vmatpush1.bf16.msra.mxu0 0
    %443 = vmatprep.subr.bf16.mxu0 0
    %444 = vmatpush1.bf16.msra.mxu0 0
    %445 = vmatprep.mubr.bf16.mxu0 0
    %446 = vmatmul.mubr.bf16.gmra.mrb[0].mxu0 %v341
    %v447 = vpop.f32.mrb[0].mxu0
    %v448 = vadd.f32 %v363, %v447
    %v449 = vpop.f32.mrb[0].mxu0
    %v450 = vpop.f32.mrb[0].mxu0
    %v451 = vpop.f32.mrb[0].mxu0
    %452 = vdwg.mxu0
    %v453 = vmax.f32 %v448, 0.0
    %v454 = vpack.c.bf16 %v453, %v453
    %v455 = vld [vmem:[%s6] sm:$0xf]
    %v456 = vld [vmem:[%s6 + $0x4] sm:$0xf]
    %v457 = vld [vmem:[%s6 + $0x8] sm:$0xf]
    %v458 = vld [vmem:[%s6 + $0xc] sm:$0xf]
    %v459 = vld [vmem:[%s6 + $0x10] sm:$0xf]
    %v460 = vld [vmem:[%s6 + $0x14] sm:$0xf]
    %v461 = vld [vmem:[%s6 + $0x18] sm:$0xf]
    %v462 = vld [vmem:[%s6 + $0x1c] sm:$0xf]
    %v463 = vld [vmem:[#allocation7] sm:$0x1]
    %v465 = vlaneseq
    %v466 = vshrl.u32 %v465, 7
    %v467 = vsub.s32 0, %v466
    %v468 = vrot.slane %v463, %v467
    %v478 = vunpack.c.l.b16 %v455
    %v479 = vunpack.c.l.b16 %v456
    %v480 = vunpack.c.l.b16 %v457
    %v481 = vunpack.c.l.b16 %v458
    %v482 = vunpack.c.l.b16 %v459
    %v483 = vunpack.c.l.b16 %v460
    %v484 = vunpack.c.l.b16 %v461
    %v485 = vunpack.c.l.b16 %v462
    %v486 = vpack.c.b16 %v479, %v478
    %v487 = vpack.c.b16 %v481, %v480
    %v488 = vpack.c.b16 %v483, %v482
    %v489 = vpack.c.b16 %v485, %v484
    %vm494 = vcmask 523264
    %v496 = vsel %vm494, %v454, 0
    %498 = vmatprep.subr.bf16.mxu0 0
    %499 = vmatpush1.bf16.msra.mxu0 %v486
    %500 = vmatprep.subr.bf16.mxu0 0
    %501 = vmatpush1.bf16.msra.mxu0 %v487
    %502 = vmatprep.subr.bf16.mxu0 0
    %503 = vmatpush1.bf16.msra.mxu0 %v488
    %504 = vmatprep.subr.bf16.mxu0 0
    %505 = vmatpush1.bf16.msra.mxu0 %v489
    %506 = vmatprep.subr.bf16.mxu0 0
    %507 = vmatpush1.bf16.msra.mxu0 0
    %508 = vmatprep.subr.bf16.mxu0 0
    %509 = vmatpush1.bf16.msra.mxu0 0
    %510 = vmatprep.subr.bf16.mxu0 0
    %511 = vmatpush1.bf16.msra.mxu0 0
    %512 = vmatprep.subr.bf16.mxu0 0
    %513 = vmatpush1.bf16.msra.mxu0 0
    %514 = vmatprep.subr.bf16.mxu0 0
    %515 = vmatpush1.bf16.msra.mxu0 0
    %516 = vmatprep.subr.bf16.mxu0 0
    %517 = vmatpush1.bf16.msra.mxu0 0
    %518 = vmatprep.subr.bf16.mxu0 0
    %519 = vmatpush1.bf16.msra.mxu0 0
    %520 = vmatprep.subr.bf16.mxu0 0
    %521 = vmatpush1.bf16.msra.mxu0 0
    %522 = vmatprep.subr.bf16.mxu0 0
    %523 = vmatpush1.bf16.msra.mxu0 0
    %524 = vmatprep.subr.bf16.mxu0 0
    %525 = vmatpush1.bf16.msra.mxu0 0
    %526 = vmatprep.subr.bf16.mxu0 0
    %527 = vmatpush1.bf16.msra.mxu0 0
    %528 = vmatprep.subr.bf16.mxu0 0
    %529 = vmatpush1.bf16.msra.mxu0 0
    %530 = vmatprep.mubr.bf16.mxu0 0
    %531 = vmatmul.mubr.bf16.gmra.mrb[0].mxu0 %v496
    %v532 = vpop.f32.mrb[0].mxu0
    %v533 = vadd.f32 %v468, %v532
    %v534 = vpop.f32.mrb[0].mxu0
    %v535 = vpop.f32.mrb[0].mxu0
    %v536 = vpop.f32.mrb[0].mxu0
    %537 = vdwg.mxu0
    %v538 = vmul.f32 %v533, 0.5
    %v539 = vmul.f32 %v538, 1.442695
    %v540 = vpow.pop %v539
    %v541 = vld [vmem:[%s1] sm:$0xff]
    %543 = vrot.lane.b32.xlu0 %v540, 112
    %v544 = vpop.permute.xlu0 %543
    %v546 = vmul.f32 %v541, %v544
    %v547 = vadd.f32 %v533, %v546
    %v548 = vpack.c.bf16 %v547, %v547
    %v549 = vld [vmem:[#allocation8] sm:$0xf]
    %v550 = vld [vmem:[#allocation8 + $0x4] sm:$0xf]
    %v551 = vld [vmem:[#allocation10] sm:$0x1]
    %v553 = vlaneseq
    %v554 = vshrl.u32 %v553, 7
    %v555 = vsub.s32 0, %v554
    %v556 = vrot.slane %v551, %v555
    %v560 = vunpack.c.l.b16 %v549
    %v561 = vunpack.c.l.b16 %v550
    %v562 = vpack.c.b16 %v561, %v560
    %vm564 = vcmask 130048
    %v566 = vsel %vm564, %v548, 0
    %568 = vmatprep.subr.bf16.mxu0 0
    %569 = vmatpush1.bf16.msra.mxu0 %v562
    %570 = vmatprep.subr.bf16.mxu0 0
    %571 = vmatpush1.bf16.msra.mxu0 0
    %572 = vmatprep.subr.bf16.mxu0 0
    %573 = vmatpush1.bf16.msra.mxu0 0
    %574 = vmatprep.subr.bf16.mxu0 0
    %575 = vmatpush1.bf16.msra.mxu0 0
    %576 = vmatprep.subr.bf16.mxu0 0
    %577 = vmatpush1.bf16.msra.mxu0 0
    %578 = vmatprep.subr.bf16.mxu0 0
    %579 = vmatpush1.bf16.msra.mxu0 0
    %580 = vmatprep.subr.bf16.mxu0 0
    %581 = vmatpush1.bf16.msra.mxu0 0
    %582 = vmatprep.subr.bf16.mxu0 0
    %583 = vmatpush1.bf16.msra.mxu0 0
    %584 = vmatprep.subr.bf16.mxu0 0
    %585 = vmatpush1.bf16.msra.mxu0 0
    %586 = vmatprep.subr.bf16.mxu0 0
    %587 = vmatpush1.bf16.msra.mxu0 0
    %588 = vmatprep.subr.bf16.mxu0 0
    %589 = vmatpush1.bf16.msra.mxu0 0
    %590 = vmatprep.subr.bf16.mxu0 0
    %591 = vmatpush1.bf16.msra.mxu0 0
    %592 = vmatprep.subr.bf16.mxu0 0
    %593 = vmatpush1.bf16.msra.mxu0 0
    %594 = vmatprep.subr.bf16.mxu0 0
    %595 = vmatpush1.bf16.msra.mxu0 0
    %596 = vmatprep.subr.bf16.mxu0 0
    %597 = vmatpush1.bf16.msra.mxu0 0
    %598 = vmatprep.subr.bf16.mxu0 0
    %599 = vmatpush1.bf16.msra.mxu0 0
    %600 = vmatprep.mubr.bf16.mxu0 0
    %601 = vmatmul.mubr.bf16.gmra.mrb[0].mxu0 %v566
    %v602 = vpop.f32.mrb[0].mxu0
    %v603 = vadd.f32 %v556, %v602
    %v604 = vpop.f32.mrb[0].mxu0
    %v605 = vpop.f32.mrb[0].mxu0
    %v606 = vpop.f32.mrb[0].mxu0
    %607 = vdwg.mxu0
    %v608 = vpack.c.bf16 %v603, %v603
    %v609 = vld [vmem:[#allocation11] sm:$0xf]
    %v610 = vld [vmem:[#allocation11 + $0x4] sm:$0xf]
    %v611 = vld [vmem:[#allocation13] sm:$0x1]
    %v613 = vlaneseq
    %v614 = vshrl.u32 %v613, 7
    %v615 = vsub.s32 0, %v614
    %v616 = vrot.slane %v611, %v615
    %v620 = vunpack.c.l.b16 %v609
    %v621 = vunpack.c.l.b16 %v610
    %v622 = vpack.c.b16 %v621, %v620
    %v625 = vsel %vm564, %v608, 0
    %627 = vmatprep.subr.bf16.mxu0 0
    %628 = vmatpush1.bf16.msra.mxu0 %v622
    %629 = vmatprep.subr.bf16.mxu0 0
    %630 = vmatpush1.bf16.msra.mxu0 0
    %631 = vmatprep.subr.bf16.mxu0 0
    %632 = vmatpush1.bf16.msra.mxu0 0
    %633 = vmatprep.subr.bf16.mxu0 0
    %634 = vmatpush1.bf16.msra.mxu0 0
    %635 = vmatprep.subr.bf16.mxu0 0
    %636 = vmatpush1.bf16.msra.mxu0 0
    %637 = vmatprep.subr.bf16.mxu0 0
    %638 = vmatpush1.bf16.msra.mxu0 0
    %639 = vmatprep.subr.bf16.mxu0 0
    %640 = vmatpush1.bf16.msra.mxu0 0
    %641 = vmatprep.subr.bf16.mxu0 0
    %642 = vmatpush1.bf16.msra.mxu0 0
    %643 = vmatprep.subr.bf16.mxu0 0
    %644 = vmatpush1.bf16.msra.mxu0 0
    %645 = vmatprep.subr.bf16.mxu0 0
    %646 = vmatpush1.bf16.msra.mxu0 0
    %647 = vmatprep.subr.bf16.mxu0 0
    %648 = vmatpush1.bf16.msra.mxu0 0
    %649 = vmatprep.subr.bf16.mxu0 0
    %650 = vmatpush1.bf16.msra.mxu0 0
    %651 = vmatprep.subr.bf16.mxu0 0
    %652 = vmatpush1.bf16.msra.mxu0 0
    %653 = vmatprep.subr.bf16.mxu0 0
    %654 = vmatpush1.bf16.msra.mxu0 0
    %655 = vmatprep.subr.bf16.mxu0 0
    %656 = vmatpush1.bf16.msra.mxu0 0
    %657 = vmatprep.subr.bf16.mxu0 0
    %658 = vmatpush1.bf16.msra.mxu0 0
    %659 = vmatprep.mubr.bf16.mxu0 0
    %660 = vmatmul.mubr.bf16.gmra.mrb[0].mxu0 %v625
    %v661 = vpop.f32.mrb[0].mxu0
    %v662 = vadd.f32 %v616, %v661
    %v663 = vpop.f32.mrb[0].mxu0
    %v664 = vpop.f32.mrb[0].mxu0
    %v665 = vpop.f32.mrb[0].mxu0
    %666 = vdwg.mxu0
    %v667 = vmax.f32 %v662, 0.0
    %v668 = vpack.c.bf16 %v667, %v667
    %v669 = vld [vmem:[#allocation14] sm:$0xff]
    %v670 = vld [vmem:[#allocation14 + $0x8] sm:$0xff]
    %v671 = vld [vmem:[#allocation14 + $0x10] sm:$0xff]
    %v672 = vld [vmem:[#allocation14 + $0x18] sm:$0xff]
    %v673 = vld [vmem:[#allocation14 + $0x20] sm:$0xff]
    %v674 = vld [vmem:[#allocation14 + $0x28] sm:$0xff]
    %v675 = vld [vmem:[#allocation14 + $0x30] sm:$0xff]
    %v676 = vld [vmem:[#allocation14 + $0x38] sm:$0xff]
    %v677 = vld [vmem:[#allocation14 + $0x40] sm:$0xff]
    %v678 = vld [vmem:[#allocation14 + $0x48] sm:$0xff]
    %v679 = vld [vmem:[#allocation14 + $0x50] sm:$0xff]
    %v680 = vld [vmem:[#allocation14 + $0x58] sm:$0xff]
    %v681 = vld [vmem:[#allocation14 + $0x60] sm:$0xff]
    %v682 = vld [vmem:[#allocation14 + $0x68] sm:$0xff]
    %v683 = vld [vmem:[#allocation14 + $0x70] sm:$0xff]
    %v684 = vld [vmem:[#allocation14 + $0x78] sm:$0xff]
    %v685 = vld [vmem:[#allocation16] sm:$0x3]
    %v687 = vlaneseq
    %v688 = vshrl.u32 %v687, 7
    %v689 = vsub.s32 0, %v688
    %v690 = vrot.slane %v685, %v689
    %v691 = vlaneseq
    %v692 = vshrl.u32 %v691, 7
    %v693 = vsub.s32 1, %v692
    %v694 = vrot.slane %v685, %v693
    %v713 = vunpack.c.l.b16 %v669
    %v714 = vunpack.c.h.b16 %v669
    %v715 = vunpack.c.l.b16 %v670
    %v716 = vunpack.c.h.b16 %v670
    %v717 = vunpack.c.l.b16 %v671
    %v718 = vunpack.c.h.b16 %v671
    %v719 = vunpack.c.l.b16 %v672
    %v720 = vunpack.c.h.b16 %v672
    %v721 = vunpack.c.l.b16 %v673
    %v722 = vunpack.c.h.b16 %v673
    %v723 = vunpack.c.l.b16 %v674
    %v724 = vunpack.c.h.b16 %v674
    %v725 = vunpack.c.l.b16 %v675
    %v726 = vunpack.c.h.b16 %v675
    %v727 = vunpack.c.l.b16 %v676
    %v728 = vunpack.c.h.b16 %v676
    %v729 = vunpack.c.l.b16 %v677
    %v730 = vunpack.c.h.b16 %v677
    %v731 = vunpack.c.l.b16 %v678
    %v732 = vunpack.c.h.b16 %v678
    %v733 = vunpack.c.l.b16 %v679
    %v734 = vunpack.c.h.b16 %v679
    %v735 = vunpack.c.l.b16 %v680
    %v736 = vunpack.c.h.b16 %v680
    %v737 = vunpack.c.l.b16 %v681
    %v738 = vunpack.c.h.b16 %v681
    %v739 = vunpack.c.l.b16 %v682
    %v740 = vunpack.c.h.b16 %v682
    %v741 = vunpack.c.l.b16 %v683
    %v742 = vunpack.c.h.b16 %v683
    %v743 = vunpack.c.l.b16 %v684
    %v744 = vunpack.c.h.b16 %v684
    %v745 = vpack.c.b16 %v715, %v713
    %v746 = vpack.c.b16 %v716, %v714
    %v747 = vpack.c.b16 %v719, %v717
    %v748 = vpack.c.b16 %v720, %v718
    %v749 = vpack.c.b16 %v723, %v721
    %v750 = vpack.c.b16 %v724, %v722
    %v751 = vpack.c.b16 %v727, %v725
    %v752 = vpack.c.b16 %v728, %v726
    %v753 = vpack.c.b16 %v731, %v729
    %v754 = vpack.c.b16 %v732, %v730
    %v755 = vpack.c.b16 %v735, %v733
    %v756 = vpack.c.b16 %v736, %v734
    %v757 = vpack.c.b16 %v739, %v737
    %v758 = vpack.c.b16 %v740, %v738
    %v759 = vpack.c.b16 %v743, %v741
    %v760 = vpack.c.b16 %v744, %v742
    %777 = vmatprep.subr.bf16.mxu0 %v746
    %778 = vmatpush1.bf16.msra.mxu0 %v745
    %779 = vmatprep.subr.bf16.mxu0 %v748
    %780 = vmatpush1.bf16.msra.mxu0 %v747
    %781 = vmatprep.subr.bf16.mxu0 %v750
    %782 = vmatpush1.bf16.msra.mxu0 %v749
    %783 = vmatprep.subr.bf16.mxu0 %v752
    %784 = vmatpush1.bf16.msra.mxu0 %v751
    %785 = vmatprep.subr.bf16.mxu0 %v754
    %786 = vmatpush1.bf16.msra.mxu0 %v753
    %787 = vmatprep.subr.bf16.mxu0 %v756
    %788 = vmatpush1.bf16.msra.mxu0 %v755
    %789 = vmatprep.subr.bf16.mxu0 %v758
    %790 = vmatpush1.bf16.msra.mxu0 %v757
    %791 = vmatprep.subr.bf16.mxu0 %v760
    %792 = vmatpush1.bf16.msra.mxu0 %v759
    %793 = vmatprep.subr.bf16.mxu0 0
    %794 = vmatpush1.bf16.msra.mxu0 0
    %795 = vmatprep.subr.bf16.mxu0 0
    %796 = vmatpush1.bf16.msra.mxu0 0
    %797 = vmatprep.subr.bf16.mxu0 0
    %798 = vmatpush1.bf16.msra.mxu0 0
    %799 = vmatprep.subr.bf16.mxu0 0
    %800 = vmatpush1.bf16.msra.mxu0 0
    %801 = vmatprep.subr.bf16.mxu0 0
    %802 = vmatpush1.bf16.msra.mxu0 0
    %803 = vmatprep.subr.bf16.mxu0 0
    %804 = vmatpush1.bf16.msra.mxu0 0
    %805 = vmatprep.subr.bf16.mxu0 0
    %806 = vmatpush1.bf16.msra.mxu0 0
    %807 = vmatprep.subr.bf16.mxu0 0
    %808 = vmatpush1.bf16.msra.mxu0 0
    %809 = vmatprep.mubr.bf16.mxu0 0
    %810 = vmatmul.mubr.bf16.gmra.mrb[0].mxu0 %v668
    %v811 = vpop.f32.mrb[0].mxu0
    %v812 = vadd.f32 %v690, %v811
    %v813 = vpop.f32.mrb[0].mxu0
    %v814 = vadd.f32 %v694, %v813
    %v815 = vpop.f32.mrb[0].mxu0
    %v816 = vpop.f32.mrb[0].mxu0
    %817 = vdwg.mxu0
    %818 = vst [vmem:[#allocation17] sm:$0xff] %v812
    %819 = vst [vmem:[#allocation17 + $0x8] sm:$0xff] %v814
    %vm820 = vcmask 261120
    %821 = vst.msk [vmem:[%s15] sm:$0xff] %vm820, %v533
    // Predicated region
    $region94: #{vae_forward.1} parent=1 // pred_check
      _
    $region95: #{vae_forward.1} parent=1 // pred_check_branch
      %823 = sbr.rel (0) target = $region97
    $region96: #{vae_forward.1} parent=1 // pred_region
      %s825 = ssub.s32 256, 256
      %826 = vsyncadd [#allocation4], %s825
      %s828 = sshll.u32 [#allocation17], 4
      %s829 = int_to_ptr.vmem [resolvable:$true] %s828
      %831 = dma.vmem_to_hbm [thread:$0]  %s829, 256, %s14, [#allocation4]
    $region97: #{vae_forward.1} parent=1 // pred_fallthru
      _
    // Predicated region
    $region98: #{vae_forward.1} parent=1 // pred_check
      _
    $region99: #{vae_forward.1} parent=1 // pred_check_branch
      %833 = sbr.rel (0) target = $region101
    $region100: #{vae_forward.1} parent=1 // pred_region
      _
    $region101: #{vae_forward.1} parent=1 // pred_fallthru
      _
    // Predicated region
    $region102: #{vae_forward.1} parent=1 // pred_check
      _
    $region103: #{vae_forward.1} parent=1 // pred_check_branch
      %835 = sbr.rel (0) target = $region105
    $region104: #{vae_forward.1} parent=1 // pred_region
      %836 = dma.done [#allocation4], 256
    $region105: #{vae_forward.1} parent=1 // pred_fallthru
      _
    // Predicated region
    $region106: #{vae_forward.1} parent=1 // pred_check
      _
    $region107: #{vae_forward.1} parent=1 // pred_check_branch
      %838 = sbr.rel (0) target = $region109
    $region108: #{vae_forward.1} parent=1 // pred_region
      _
    $region109: #{vae_forward.1} parent=1 // pred_fallthru
      _
    %839 = vsyncpa [#allocation3], 1
    %840 = vsyncpa [#allocation6], 1
    %841 = vsyncpa [#allocation9], 1
    %842 = vsyncpa [#allocation12], 1
    %843 = vsyncpa [#allocation15], 1
    %844 = vsyncpa [#allocation4], 1

</llo_original>
